<compile_context>
chip_gen: v6e
topology: v6e:2x2x1
jax: 0.10.0
libtpu: 0.0.40
codegen_flags: <defaults>
</compile_context>

<pallas_src>
import functools

import jax
import jax.numpy as jnp
from jax.experimental import pallas as pl
from jax.experimental.pallas import tpu as pltpu

SUBLANE = 8        # sublane group size (candidate axis rounded up to this)
PAIR_LANES = 8     # pair axis padded to 8 lanes (P=3 fits)
BATCH_TILE = 128   # batch elements per grid step (one lane width)


def _doa_batched_kernel(num_pairs, pp_ref, ph_ref, out_ref):
    """pp_ref : (Rp, PAIR_LANES)   table  — candidates on sublanes, pairs on lanes
    ph_ref : (PAIR_LANES, TB)    phases — pairs on sublanes, batch on lanes
    out_ref: (1, TB)             per-batch-element minima (lane dense)."""
    pp = pp_ref[...]
    ph = ph_ref[...]
    sim = None
    for p in range(num_pairs):                        # P is tiny (3) -> unrolled
        d = pp[:, p:p + 1] - ph[p:p + 1, :]           # (Rp,1)-(1,TB) -> (Rp,TB)
        sim = d * d if sim is None else sim + d * d
    # Min over the candidate (sublane) axis -> naturally lane-dense (1, TB).
    out_ref[...] = jnp.min(sim, axis=0, keepdims=True)


def prepare_table(possible_phases):
    """(R, P) float table -> ((Rp, PAIR_LANES) padded table, num_pairs).

    Call once (the DOA manifold is static).  Padded candidate rows replicate
    candidate 0 so they cannot change the minimum; padded pair lanes are never
    read by the kernel (it loops only over the real P pairs)."""
    pp = jnp.asarray(possible_phases, jnp.float32)
    R, P = pp.shape
    assert 1 <= P <= PAIR_LANES, "pair dimension must fit in PAIR_LANES"
    Rp = ((R + SUBLANE - 1) // SUBLANE) * SUBLANE

    tbl = jnp.zeros((Rp, PAIR_LANES), jnp.float32)
    tbl = tbl.at[:R, :P].set(pp)
    if Rp != R:
        tbl = tbl.at[R:, :P].set(jnp.broadcast_to(pp[:1, :], (Rp - R, P)))
    return tbl, P


def doa_pattern_loss_batched(table, phases):
    """table: output of prepare_table; phases: (B, P) -> (B,) minima."""
    tbl, num_pairs = table
    phases = jnp.asarray(phases, jnp.float32)
    assert phases.ndim == 2 and phases.shape[1] == num_pairs, (
        "phases must be (B, P) with P matching the prepared table")
    B = phases.shape[0]
    Bp = ((B + BATCH_TILE - 1) // BATCH_TILE) * BATCH_TILE
    Rp = tbl.shape[0]

    # Tiny layout plumbing (folds under jit): pairs on sublanes, batch on lanes.
    # Padded pair sublanes / batch lanes are zero; padded pairs are never read,
    # padded batch columns are sliced off below.
    ph = jnp.zeros((PAIR_LANES, Bp), jnp.float32).at[:num_pairs, :B].set(phases.T)

    kernel = functools.partial(_doa_batched_kernel, num_pairs)
    out = pl.pallas_call(
        kernel,
        out_shape=jax.ShapeDtypeStruct((1, Bp), jnp.float32),
        grid=(Bp // BATCH_TILE,),
        in_specs=[
            # Whole table, same block every step -> stays resident in VMEM.
            pl.BlockSpec((Rp, PAIR_LANES), lambda i: (0, 0)),
            pl.BlockSpec((PAIR_LANES, BATCH_TILE), lambda i: (0, i)),
        ],
        out_specs=pl.BlockSpec((1, BATCH_TILE), lambda i: (0, i)),
        compiler_params=pltpu.CompilerParams(
            dimension_semantics=("parallel",)),
    )(tbl, ph)
    return out[0, :B]


def doa_pattern_loss(table, phases):
    """Single phase vector (P,) -> scalar loss (matches the PyTorch forward)."""
    return doa_pattern_loss_batched(table, phases[None, :])[0]


if __name__ == "__main__":
    resolution = 360   # number of candidate DOA angles
    num_pairs = 3      # number of antenna-pair phase measurements
    batch = 200        # batch of phase vectors evaluated in one pallas_call

    # TODO(synk): PhaseSpace.phase_curve is not available; the phase manifold
    # is synthesized deterministically here: phase diff of pair k at steering
    # angle theta ~ 2*pi*d_k*sin(theta).
    theta = jnp.linspace(-jnp.pi / 2.0, jnp.pi / 2.0, resolution)
    baselines = jnp.arange(1, num_pairs + 1, dtype=jnp.float32) * 0.35
    possible_phases = (jnp.sin(theta)[:, None] * 2.0 * jnp.pi
                       * baselines[None, :]).astype(jnp.float32)

    table = prepare_table(possible_phases)     # one-time: manifold is static

    key = jax.random.PRNGKey(0)
    phases_batch = jax.random.uniform(key, (batch, num_pairs), jnp.float32,
                                      minval=-jnp.pi, maxval=jnp.pi)

    batched_loss = jax.jit(lambda ph: doa_pattern_loss_batched(table, ph))
    single_loss = jax.jit(lambda ph: doa_pattern_loss(table, ph))

    losses = jax.block_until_ready(batched_loss(phases_batch))     # (batch,)
    loss0 = jax.block_until_ready(single_loss(phases_batch[0]))    # scalar

    # Pure-JAX reference (same semantics as the PyTorch forward, per element).
    sims = jnp.sum((possible_phases[None, :, :] - phases_batch[:, None, :]) ** 2,
                   axis=-1)                                        # (B, R)
    ref = jnp.min(sims, axis=-1)                                   # (B,)

    assert losses.shape == (batch,)
    assert jnp.allclose(losses, ref, rtol=1e-5, atol=1e-5), (losses[:4], ref[:4])
    assert jnp.allclose(loss0, ref[0], rtol=1e-5, atol=1e-5), (loss0, ref[0])

    print("KERNEL_OK")
</pallas_src>

<mosaic_0001>
module attributes {stable_mosaic.version = 11 : i64} {
  func.func @_doa_batched_kernel(%arg0: i32, %arg1: memref<360x8xf32, #tpu.memory_space<vmem>>, %arg2: memref<8x128xf32, #tpu.memory_space<vmem>>, %arg3: memref<1x128xf32, #tpu.memory_space<vmem>>) attributes {dimension_semantics = [#tpu.dimension_semantics<parallel>], iteration_bounds = array<i64: 2>, scalar_prefetch = 0 : i64, scratch_operands = 0 : i64, tpu.core_type = #tpu.core_type<tc>, window_params = [{pipeline_mode = #tpu.pipeline_mode<synchronous>, transform_indices = @transform_0, window_bounds = array<i64: 360, 8>}, {transform_indices = @transform_1, window_bounds = array<i64: 8, 128>}, {transform_indices = @transform_2, window_bounds = array<i64: 1, 128>}]} {
    %c0 = arith.constant 0 : index
    %c0_0 = arith.constant 0 : index
    %0 = vector.load %arg1[%c0, %c0_0] : memref<360x8xf32, #tpu.memory_space<vmem>>, vector<360x8xf32>
    %c0_1 = arith.constant 0 : index
    %c0_2 = arith.constant 0 : index
    %1 = vector.load %arg2[%c0_1, %c0_2] : memref<8x128xf32, #tpu.memory_space<vmem>>, vector<8x128xf32>
    %2 = vector.extract_strided_slice %0 {offsets = [0, 0], sizes = [360, 1], strides = [1, 1]} : vector<360x8xf32> to vector<360x1xf32>
    %3 = vector.extract_strided_slice %1 {offsets = [0, 0], sizes = [1, 128], strides = [1, 1]} : vector<8x128xf32> to vector<1x128xf32>
    %4 = vector.broadcast %2 : vector<360x1xf32> to vector<360x128xf32>
    %5 = vector.broadcast %3 : vector<1x128xf32> to vector<360x128xf32>
    %6 = arith.subf %4, %5 : vector<360x128xf32>
    %7 = arith.mulf %6, %6 : vector<360x128xf32>
    %8 = vector.extract_strided_slice %0 {offsets = [0, 1], sizes = [360, 1], strides = [1, 1]} : vector<360x8xf32> to vector<360x1xf32>
    %9 = vector.extract_strided_slice %1 {offsets = [1, 0], sizes = [1, 128], strides = [1, 1]} : vector<8x128xf32> to vector<1x128xf32>
    %10 = vector.broadcast %8 : vector<360x1xf32> to vector<360x128xf32>
    %11 = vector.broadcast %9 : vector<1x128xf32> to vector<360x128xf32>
    %12 = arith.subf %10, %11 : vector<360x128xf32>
    %13 = arith.mulf %12, %12 : vector<360x128xf32>
    %14 = arith.addf %7, %13 : vector<360x128xf32>
    %15 = vector.extract_strided_slice %0 {offsets = [0, 2], sizes = [360, 1], strides = [1, 1]} : vector<360x8xf32> to vector<360x1xf32>
    %16 = vector.extract_strided_slice %1 {offsets = [2, 0], sizes = [1, 128], strides = [1, 1]} : vector<8x128xf32> to vector<1x128xf32>
    %17 = vector.broadcast %15 : vector<360x1xf32> to vector<360x128xf32>
    %18 = vector.broadcast %16 : vector<1x128xf32> to vector<360x128xf32>
    %19 = arith.subf %17, %18 : vector<360x128xf32>
    %20 = arith.mulf %19, %19 : vector<360x128xf32>
    %21 = arith.addf %14, %20 : vector<360x128xf32>
    %cst = arith.constant dense<0x7F800000> : vector<128xf32>
    %22 = vector.multi_reduction <minimumf>, %21, %cst [0] : vector<360x128xf32> to vector<128xf32>
    %23 = vector.shape_cast %22 : vector<128xf32> to vector<1x128xf32>
    %c0_3 = arith.constant 0 : index
    %c0_4 = arith.constant 0 : index
    %24 = vector.load %arg3[%c0_3, %c0_4] : memref<1x128xf32, #tpu.memory_space<vmem>>, vector<1x128xf32>
    tpu.vector_store %arg3[%c0_3, %c0_4], %23 {strides = array<i32>} : memref<1x128xf32, #tpu.memory_space<vmem>>, vector<1x128xf32>,
    return
  }
  func.func @transform_0(%arg0: i32) -> (i32, i32) {
    %c0_i32 = arith.constant 0 : i32
    %c0_i32_0 = arith.constant 0 : i32
    %c0_i32_1 = arith.constant 0 : i32
    return %c0_i32, %c0_i32_0 : i32, i32
  }
  func.func @transform_1(%arg0: i32) -> (i32, i32) {
    %c0_i32 = arith.constant 0 : i32
    %c0_i32_0 = arith.constant 0 : i32
    return %c0_i32, %arg0 : i32, i32
  }
  func.func @transform_2(%arg0: i32) -> (i32, i32) {
    %c0_i32 = arith.constant 0 : i32
    %c0_i32_0 = arith.constant 0 : i32
    return %c0_i32, %arg0 : i32, i32
  }
}

</mosaic_0001>

<llo_original>
// kernel: _lambda_.1
$region0: #{_lambda_.1}
  #allocation0 [shape = 'u32[]', space=smem, size = 0x4, offset = 0x4, fixed_abs, tag = 'smem constant byte address 0x4 - core index']
  #allocation1 [shape = 'u32[144,128]{1,0:T(1,128)}', space=vmem, size = 0x12000, scoped, tag = 'internal scratch']
  %s0 = inlined_call_operand.hbm [shape: f32[360,8], index: 0, kind: input, shape index: {}]
  %s1 = inlined_call_operand.vmem [shape: f32[8,256], index: 1, kind: input, shape index: {}]
  %s2 = inlined_call_operand.hbm [shape: f32[1,256], index: 2, kind: output, shape index: {}]
  %s3 = sld [smem:[#allocation0]]
  $region45: #{_lambda_.1} parent=0
    _
  %s5 = ssub.s32 1, %s3
  %s6 = scalar_select 0, %s5, %s3
  $region1: #{_lambda_.1} parent=0
    #allocation2 [shape = 'u8[184320]{0}', space=vmem, size = 0x2d000, scoped, tag = 'input window, operand 0, single buffered']
    #allocation3 [shape = 's32[2]{0}', space=sflag, size = 0x8, scoped, tag = 'scoped memory for _lambda_.1']
    #allocation4 [shape = 's32[2]{0}', space=sflag, size = 0x8, scoped, tag = 'scoped memory for _lambda_.1']
    #allocation5 [shape = 'u8[1024]{0}', space=vmem, size = 0x400, scoped, tag = 'output window, operand 0']
    %7 = vsyncpa [#allocation3], 0
    %8 = vsyncpa [#allocation4], 0
    %s9 = scalar_lea.sflag [#allocation4], 1
    %10 = vsyncpa %s9, 0
    loop: start=0, step=1, limit=4
    $region2: #{_lambda_.1} parent=1 // loop_pre_header
      _
    $region3: #{_lambda_.1} parent=1 // loop_header
      %s12 = sphi 0, %s16
      %p13 = scmp.ge.s32.totalorder %s12, 4
      %s20 = sphi 0, %s20
      %s22 = sphi 0, %s20
      %s23 = sphi 0, %s22
      %s37 = sphi 0, %s23
      %s43 = sphi 0, %s45
      %s46 = sphi 0, %s43
      %s47 = sphi 0, %s46
      %s63 = sphi 0, %s47
      %s69 = sphi 0, %s71
      %s72 = sphi 0, %s69
      %s73 = sphi 0, %s72
      %s89 = sphi 0, %s73
    $region4: #{_lambda_.1} parent=1 // loop_header_branch
      %15 = sbr.rel (%p13) target = $region8
    $region5: #{_lambda_.1} parent=1 // loop_body
      %s17 = ssub.s32 %s12, 1
      %s18 = ssub.s32 %s12, 2
      %s19 = sadd.s32 %s12, 1
      %s21 = sadd.s32 %s20, 1
      %p24 = scmp.eq.s32.totalorder %s12, 1
      %p25 = scmp.ne.s32.totalorder %s20, %s22
      %p26 = scmp.eq.s32.totalorder %s12, 0
      %p27 = por %p25, %p26
      %p28 = scmp.ne.s32.totalorder %s20, %s22
      %p29 = scmp.eq.s32.totalorder %s17, 1
      %p30 = por %p28, %p29
      %p31 = scmp.ne.s32.totalorder %s22, %s23
      %p32 = scmp.eq.s32.totalorder %s17, 0
      %p33 = por %p31, %p32
      %p34 = scmp.ne.s32.totalorder %s22, %s23
      %p35 = scmp.eq.s32.totalorder %s18, 1
      %p36 = por %p34, %p35
      %p38 = scmp.ne.s32.totalorder %s23, %s37
      %p39 = scmp.eq.s32.totalorder %s18, 0
      %p40 = por %p38, %p39
      %s41 = ssub.s32 %s12, %s19
      %p42 = scmp.eq.s32.totalorder %s41, 0
      %s44 = sadd.s32 %s43, 1
      %s45 = scalar_select %p42, %s43, %s44
      %p48 = pneg %p42
      %p49 = scmp.eq.s32.totalorder %s12, 1
      %p50 = por %p48, %p49
      %p51 = scmp.ne.s32.totalorder %s43, %s46
      %p52 = scmp.eq.s32.totalorder %s12, 0
      %p53 = por %p51, %p52
      %p54 = scmp.ne.s32.totalorder %s43, %s46
      %p55 = scmp.eq.s32.totalorder %s17, 1
      %p56 = por %p54, %p55
      %p57 = scmp.ne.s32.totalorder %s46, %s47
      %p58 = scmp.eq.s32.totalorder %s17, 0
      %p59 = por %p57, %p58
      %p60 = scmp.ne.s32.totalorder %s46, %s47
      %p61 = scmp.eq.s32.totalorder %s18, 1
      %p62 = por %p60, %p61
      %p64 = scmp.ne.s32.totalorder %s47, %s63
      %p65 = scmp.eq.s32.totalorder %s18, 0
      %p66 = por %p64, %p65
      %s67 = ssub.s32 %s12, %s19
      %p68 = scmp.eq.s32.totalorder %s67, 0
      %s70 = sadd.s32 %s69, 1
      %s71 = scalar_select %p68, %s69, %s70
      %p74 = pneg %p68
      %p75 = scmp.eq.s32.totalorder %s12, 1
      %p76 = por %p74, %p75
      %p77 = scmp.ne.s32.totalorder %s69, %s72
      %p78 = scmp.eq.s32.totalorder %s12, 0
      %p79 = por %p77, %p78
      %p80 = scmp.ne.s32.totalorder %s69, %s72
      %p81 = scmp.eq.s32.totalorder %s17, 1
      %p82 = por %p80, %p81
      %p83 = scmp.ne.s32.totalorder %s72, %s73
      %p84 = scmp.eq.s32.totalorder %s17, 0
      %p85 = por %p83, %p84
      %p86 = scmp.ne.s32.totalorder %s72, %s73
      %p87 = scmp.eq.s32.totalorder %s18, 1
      %p88 = por %p86, %p87
      %p90 = scmp.ne.s32.totalorder %s73, %s89
      %p91 = scmp.eq.s32.totalorder %s18, 0
      %p92 = por %p90, %p91
      %p93 = scmp.le.s32.totalorder 1, %s12
      %p94 = scmp.lt.s32.totalorder %s12, 3
      %p95 = pnand %p93, %p94
      %p96 = pneg %p95
      // Predicated region
      $region9: #{_lambda_.1} parent=5 // pred_check
        _
      $region10: #{_lambda_.1} parent=5 // pred_check_branch
        %98 = sbr.rel (%p95) target = $region12
      $region11: #{_lambda_.1} parent=5 // pred_region
        %s99 = ssub.s32 %s12, 1
        // Predicated region
        $region13: #{_lambda_.1} parent=11 // pred_check
          %p100 = pneg %p33
        $region14: #{_lambda_.1} parent=11 // pred_check_branch
          %102 = sbr.rel (%p100) target = $region16
        $region15: #{_lambda_.1} parent=11 // pred_region
          %s104 = ssub.s32 5760, 5760
          %105 = vsyncadd [#allocation3], %s104
          %s106 = sshll.u32 [#allocation2], 4
          %s107 = int_to_ptr.vmem [resolvable:$true] %s106
          %112 = dma.hbm_to_vmem [thread:$0]  %s0, 5760, %s107, [#allocation3], 128, 128, 8
        $region16: #{_lambda_.1} parent=11 // pred_fallthru
          _
      $region12: #{_lambda_.1} parent=5 // pred_fallthru
        _
      %p113 = scmp.lt.s32.totalorder %s12, 2
      // Predicated region
      $region17: #{_lambda_.1} parent=5 // pred_check
        %p114 = pneg %p113
      $region18: #{_lambda_.1} parent=5 // pred_check_branch
        %116 = sbr.rel (%p114) target = $region20
      $region19: #{_lambda_.1} parent=5 // pred_region
        // Predicated region
        $region21: #{_lambda_.1} parent=19 // pred_check
          %p117 = pneg %p53
        $region22: #{_lambda_.1} parent=19 // pred_check_branch
          %119 = sbr.rel (%p117) target = $region24
        $region23: #{_lambda_.1} parent=19 // pred_region
          %p120 = scmp.lt.s32.totalorder %s12, 1
          %s121 = scalar_select %p120, %s12, 1
          %s122 = smul.addr %s121, 8
          %s123 = scalar_lea.vmem %s1, %s122
        $region24: #{_lambda_.1} parent=19 // pred_fallthru
          _
      $region20: #{_lambda_.1} parent=5 // pred_fallthru
        _
      %p124 = scmp.le.s32.totalorder 1, %s12
      %p125 = scmp.lt.s32.totalorder %s12, 3
      %p126 = pnand %p124, %p125
      %p127 = pneg %p126
      // Predicated region
      $region25: #{_lambda_.1} parent=5 // pred_check
        _
      $region26: #{_lambda_.1} parent=5 // pred_check_branch
        %129 = sbr.rel (%p126) target = $region28
      $region27: #{_lambda_.1} parent=5 // pred_region
        %s130 = ssub.s32 %s12, 1
        // Predicated region
        $region29: #{_lambda_.1} parent=27 // pred_check
          %p131 = pneg %p33
        $region30: #{_lambda_.1} parent=27 // pred_check_branch
          %133 = sbr.rel (%p131) target = $region32
        $region31: #{_lambda_.1} parent=27 // pred_region
          %134 = dma.done [#allocation3], 5760
        $region32: #{_lambda_.1} parent=27 // pred_fallthru
          _
        %p135 = pneg %p33
        %p136 = pneg %p30
        %p137 = scmp.lt.s32.totalorder %s17, 1
        %s138 = scalar_select %p137, %s17, 1
        %s139 = smul.addr %s138, 8
        %s140 = scalar_lea.vmem %s1, %s139
        %p141 = pneg %p59
        %p142 = pneg %p56
        %p143 = pneg %p85
        %p144 = pneg %p82
        %s145 = sand.u32 %s72, 1
        %s146 = scalar_lea.sflag [#allocation4], %s145
        %s147 = sand.u32 %s72, 1
        %s148 = scalar_lea.vmem [#allocation5], %s147
        %p149 = scmp.lt.s32.totalorder %s17, 1
        %s150 = scalar_select %p149, %s17, 1
        %s151 = smul.addr %s150, 8
        %s152 = scalar_lea.vmem %s1, %s151
        %v153 = vld [vmem:[#allocation2] sm:$0xff]
        %v154 = vld [vmem:[#allocation2 + $0x8] sm:$0xff]
        %v155 = vld [vmem:[#allocation2 + $0x10] sm:$0xff]
        %v156 = vld [vmem:[#allocation2 + $0x18] sm:$0xff]
        %v157 = vld [vmem:[#allocation2 + $0x20] sm:$0xff]
        %v158 = vld [vmem:[#allocation2 + $0x28] sm:$0xff]
        %v159 = vld [vmem:[#allocation2 + $0x30] sm:$0xff]
        %v160 = vld [vmem:[#allocation2 + $0x38] sm:$0xff]
        %v161 = vld [vmem:[#allocation2 + $0x40] sm:$0xff]
        %v162 = vld [vmem:[#allocation2 + $0x48] sm:$0xff]
        %v163 = vld [vmem:[#allocation2 + $0x50] sm:$0xff]
        %v164 = vld [vmem:[#allocation2 + $0x58] sm:$0xff]
        %v165 = vld [vmem:[#allocation2 + $0x60] sm:$0xff]
        %v166 = vld [vmem:[#allocation2 + $0x68] sm:$0xff]
        %v167 = vld [vmem:[#allocation2 + $0x70] sm:$0xff]
        %v168 = vld [vmem:[#allocation2 + $0x78] sm:$0xff]
        %v169 = vld [vmem:[#allocation2 + $0x80] sm:$0xff]
        %v170 = vld [vmem:[#allocation2 + $0x88] sm:$0xff]
        %v171 = vld [vmem:[#allocation2 + $0x90] sm:$0xff]
        %v172 = vld [vmem:[#allocation2 + $0x98] sm:$0xff]
        %v173 = vld [vmem:[#allocation2 + $0xa0] sm:$0xff]
        %v174 = vld [vmem:[#allocation2 + $0xa8] sm:$0xff]
        %v175 = vld [vmem:[#allocation2 + $0xb0] sm:$0xff]
        %v176 = vld [vmem:[#allocation2 + $0xb8] sm:$0xff]
        %v177 = vld [vmem:[#allocation2 + $0xc0] sm:$0xff]
        %v178 = vld [vmem:[#allocation2 + $0xc8] sm:$0xff]
        %v179 = vld [vmem:[#allocation2 + $0xd0] sm:$0xff]
        %v180 = vld [vmem:[#allocation2 + $0xd8] sm:$0xff]
        %v181 = vld [vmem:[#allocation2 + $0xe0] sm:$0xff]
        %v182 = vld [vmem:[#allocation2 + $0xe8] sm:$0xff]
        %v183 = vld [vmem:[#allocation2 + $0xf0] sm:$0xff]
        %v184 = vld [vmem:[#allocation2 + $0xf8] sm:$0xff]
        %v185 = vld [vmem:[#allocation2 + $0x100] sm:$0xff]
        %v186 = vld [vmem:[#allocation2 + $0x108] sm:$0xff]
        %v187 = vld [vmem:[#allocation2 + $0x110] sm:$0xff]
        %v188 = vld [vmem:[#allocation2 + $0x118] sm:$0xff]
        %v189 = vld [vmem:[#allocation2 + $0x120] sm:$0xff]
        %v190 = vld [vmem:[#allocation2 + $0x128] sm:$0xff]
        %v191 = vld [vmem:[#allocation2 + $0x130] sm:$0xff]
        %v192 = vld [vmem:[#allocation2 + $0x138] sm:$0xff]
        %v193 = vld [vmem:[#allocation2 + $0x140] sm:$0xff]
        %v194 = vld [vmem:[#allocation2 + $0x148] sm:$0xff]
        %v195 = vld [vmem:[#allocation2 + $0x150] sm:$0xff]
        %v196 = vld [vmem:[#allocation2 + $0x158] sm:$0xff]
        %v197 = vld [vmem:[#allocation2 + $0x160] sm:$0xff]
        %v198 = vld [vmem:[%s152] sm:$0xff]
        %200 = vset.pattern.permute.xlu0 0
        %201 = vperm.xlu0 %200, %v153
        %v202 = vpop.permute.xlu0 %201
        %205 = vset.pattern.permute.xlu0 0
        %206 = vperm.xlu0 %205, %v154
        %v207 = vpop.permute.xlu0 %206
        %210 = vset.pattern.permute.xlu0 0
        %211 = vperm.xlu0 %210, %v155
        %v212 = vpop.permute.xlu0 %211
        %215 = vset.pattern.permute.xlu0 0
        %216 = vperm.xlu0 %215, %v156
        %v217 = vpop.permute.xlu0 %216
        %220 = vset.pattern.permute.xlu0 0
        %221 = vperm.xlu0 %220, %v157
        %v222 = vpop.permute.xlu0 %221
        %225 = vset.pattern.permute.xlu0 0
        %226 = vperm.xlu0 %225, %v158
        %v227 = vpop.permute.xlu0 %226
        %230 = vset.pattern.permute.xlu0 0
        %231 = vperm.xlu0 %230, %v159
        %v232 = vpop.permute.xlu0 %231
        %235 = vset.pattern.permute.xlu0 0
        %236 = vperm.xlu0 %235, %v160
        %v237 = vpop.permute.xlu0 %236
        %240 = vset.pattern.permute.xlu0 0
        %241 = vperm.xlu0 %240, %v161
        %v242 = vpop.permute.xlu0 %241
        %245 = vset.pattern.permute.xlu0 0
        %246 = vperm.xlu0 %245, %v162
        %v247 = vpop.permute.xlu0 %246
        %250 = vset.pattern.permute.xlu0 0
        %251 = vperm.xlu0 %250, %v163
        %v252 = vpop.permute.xlu0 %251
        %255 = vset.pattern.permute.xlu0 0
        %256 = vperm.xlu0 %255, %v164
        %v257 = vpop.permute.xlu0 %256
        %260 = vset.pattern.permute.xlu0 0
        %261 = vperm.xlu0 %260, %v165
        %v262 = vpop.permute.xlu0 %261
        %265 = vset.pattern.permute.xlu0 0
        %266 = vperm.xlu0 %265, %v166
        %v267 = vpop.permute.xlu0 %266
        %270 = vset.pattern.permute.xlu0 0
        %271 = vperm.xlu0 %270, %v167
        %v272 = vpop.permute.xlu0 %271
        %275 = vset.pattern.permute.xlu0 0
        %276 = vperm.xlu0 %275, %v168
        %v277 = vpop.permute.xlu0 %276
        %280 = vset.pattern.permute.xlu0 0
        %281 = vperm.xlu0 %280, %v169
        %v282 = vpop.permute.xlu0 %281
        %285 = vset.pattern.permute.xlu0 0
        %286 = vperm.xlu0 %285, %v170
        %v287 = vpop.permute.xlu0 %286
        %290 = vset.pattern.permute.xlu0 0
        %291 = vperm.xlu0 %290, %v171
        %v292 = vpop.permute.xlu0 %291
        %295 = vset.pattern.permute.xlu0 0
        %296 = vperm.xlu0 %295, %v172
        %v297 = vpop.permute.xlu0 %296
        %300 = vset.pattern.permute.xlu0 0
        %301 = vperm.xlu0 %300, %v173
        %v302 = vpop.permute.xlu0 %301
        %305 = vset.pattern.permute.xlu0 0
        %306 = vperm.xlu0 %305, %v174
        %v307 = vpop.permute.xlu0 %306
        %310 = vset.pattern.permute.xlu0 0
        %311 = vperm.xlu0 %310, %v175
        %v312 = vpop.permute.xlu0 %311
        %315 = vset.pattern.permute.xlu0 0
        %316 = vperm.xlu0 %315, %v176
        %v317 = vpop.permute.xlu0 %316
        %320 = vset.pattern.permute.xlu0 0
        %321 = vperm.xlu0 %320, %v177
        %v322 = vpop.permute.xlu0 %321
        %325 = vset.pattern.permute.xlu0 0
        %326 = vperm.xlu0 %325, %v178
        %v327 = vpop.permute.xlu0 %326
        %330 = vset.pattern.permute.xlu0 0
        %331 = vperm.xlu0 %330, %v179
        %v332 = vpop.permute.xlu0 %331
        %335 = vset.pattern.permute.xlu0 0
        %336 = vperm.xlu0 %335, %v180
        %v337 = vpop.permute.xlu0 %336
        %340 = vset.pattern.permute.xlu0 0
        %341 = vperm.xlu0 %340, %v181
        %v342 = vpop.permute.xlu0 %341
        %345 = vset.pattern.permute.xlu0 0
        %346 = vperm.xlu0 %345, %v182
        %v347 = vpop.permute.xlu0 %346
        %350 = vset.pattern.permute.xlu0 0
        %351 = vperm.xlu0 %350, %v183
        %v352 = vpop.permute.xlu0 %351
        %355 = vset.pattern.permute.xlu0 0
        %356 = vperm.xlu0 %355, %v184
        %v357 = vpop.permute.xlu0 %356
        %360 = vset.pattern.permute.xlu0 0
        %361 = vperm.xlu0 %360, %v185
        %v362 = vpop.permute.xlu0 %361
        %365 = vset.pattern.permute.xlu0 0
        %366 = vperm.xlu0 %365, %v186
        %v367 = vpop.permute.xlu0 %366
        %370 = vset.pattern.permute.xlu0 0
        %371 = vperm.xlu0 %370, %v187
        %v372 = vpop.permute.xlu0 %371
        %375 = vset.pattern.permute.xlu0 0
        %376 = vperm.xlu0 %375, %v188
        %v377 = vpop.permute.xlu0 %376
        %380 = vset.pattern.permute.xlu0 0
        %381 = vperm.xlu0 %380, %v189
        %v382 = vpop.permute.xlu0 %381
        %385 = vset.pattern.permute.xlu0 0
        %386 = vperm.xlu0 %385, %v190
        %v387 = vpop.permute.xlu0 %386
        %390 = vset.pattern.permute.xlu0 0
        %391 = vperm.xlu0 %390, %v191
        %v392 = vpop.permute.xlu0 %391
        %395 = vset.pattern.permute.xlu0 0
        %396 = vperm.xlu0 %395, %v192
        %v397 = vpop.permute.xlu0 %396
        %400 = vset.pattern.permute.xlu0 0
        %401 = vperm.xlu0 %400, %v193
        %v402 = vpop.permute.xlu0 %401
        %405 = vset.pattern.permute.xlu0 0
        %406 = vperm.xlu0 %405, %v194
        %v407 = vpop.permute.xlu0 %406
        %410 = vset.pattern.permute.xlu0 0
        %411 = vperm.xlu0 %410, %v195
        %v412 = vpop.permute.xlu0 %411
        %415 = vset.pattern.permute.xlu0 0
        %416 = vperm.xlu0 %415, %v196
        %v417 = vpop.permute.xlu0 %416
        %420 = vset.pattern.permute.xlu0 0
        %421 = vperm.xlu0 %420, %v197
        %v422 = vpop.permute.xlu0 %421
        %v424 = vlaneseq
        %v425 = vshrl.u32 %v424, 7
        %v426 = vsub.s32 0, %v425
        %v427 = vrot.slane %v198, %v426
        %v428 = vsub.f32 %v202, %v427
        %v429 = vsub.f32 %v207, %v427
        %v430 = vsub.f32 %v212, %v427
        %v431 = vsub.f32 %v217, %v427
        %v432 = vsub.f32 %v222, %v427
        %v433 = vsub.f32 %v227, %v427
        %v434 = vsub.f32 %v232, %v427
        %v435 = vsub.f32 %v237, %v427
        %v436 = vsub.f32 %v242, %v427
        %v437 = vsub.f32 %v247, %v427
        %v438 = vsub.f32 %v252, %v427
        %v439 = vsub.f32 %v257, %v427
        %v440 = vsub.f32 %v262, %v427
        %v441 = vsub.f32 %v267, %v427
        %v442 = vsub.f32 %v272, %v427
        %v443 = vsub.f32 %v277, %v427
        %v444 = vsub.f32 %v282, %v427
        %v445 = vsub.f32 %v287, %v427
        %v446 = vsub.f32 %v292, %v427
        %v447 = vsub.f32 %v297, %v427
        %v448 = vsub.f32 %v302, %v427
        %v449 = vsub.f32 %v307, %v427
        %v450 = vsub.f32 %v312, %v427
        %v451 = vsub.f32 %v317, %v427
        %v452 = vsub.f32 %v322, %v427
        %v453 = vsub.f32 %v327, %v427
        %v454 = vsub.f32 %v332, %v427
        %v455 = vsub.f32 %v337, %v427
        %v456 = vsub.f32 %v342, %v427
        %v457 = vsub.f32 %v347, %v427
        %v458 = vsub.f32 %v352, %v427
        %v459 = vsub.f32 %v357, %v427
        %v460 = vsub.f32 %v362, %v427
        %v461 = vsub.f32 %v367, %v427
        %v462 = vsub.f32 %v372, %v427
        %v463 = vsub.f32 %v377, %v427
        %v464 = vsub.f32 %v382, %v427
        %v465 = vsub.f32 %v387, %v427
        %v466 = vsub.f32 %v392, %v427
        %v467 = vsub.f32 %v397, %v427
        %v468 = vsub.f32 %v402, %v427
        %v469 = vsub.f32 %v407, %v427
        %v470 = vsub.f32 %v412, %v427
        %v471 = vsub.f32 %v417, %v427
        %v472 = vsub.f32 %v422, %v427
        %v473 = vmul.f32 %v428, %v428
        %v474 = vmul.f32 %v429, %v429
        %v475 = vmul.f32 %v430, %v430
        %v476 = vmul.f32 %v431, %v431
        %v477 = vmul.f32 %v432, %v432
        %v478 = vmul.f32 %v433, %v433
        %v479 = vmul.f32 %v434, %v434
        %v480 = vmul.f32 %v435, %v435
        %v481 = vmul.f32 %v436, %v436
        %v482 = vmul.f32 %v437, %v437
        %v483 = vmul.f32 %v438, %v438
        %v484 = vmul.f32 %v439, %v439
        %v485 = vmul.f32 %v440, %v440
        %v486 = vmul.f32 %v441, %v441
        %v487 = vmul.f32 %v442, %v442
        %v488 = vmul.f32 %v443, %v443
        %v489 = vmul.f32 %v444, %v444
        %v490 = vmul.f32 %v445, %v445
        %v491 = vmul.f32 %v446, %v446
        %v492 = vmul.f32 %v447, %v447
        %v493 = vmul.f32 %v448, %v448
        %v494 = vmul.f32 %v449, %v449
        %v495 = vmul.f32 %v450, %v450
        %v496 = vmul.f32 %v451, %v451
        %v497 = vmul.f32 %v452, %v452
        %v498 = vmul.f32 %v453, %v453
        %v499 = vmul.f32 %v454, %v454
        %v500 = vmul.f32 %v455, %v455
        %v501 = vmul.f32 %v456, %v456
        %v502 = vmul.f32 %v457, %v457
        %v503 = vmul.f32 %v458, %v458
        %v504 = vmul.f32 %v459, %v459
        %v505 = vmul.f32 %v460, %v460
        %v506 = vmul.f32 %v461, %v461
        %v507 = vmul.f32 %v462, %v462
        %v508 = vmul.f32 %v463, %v463
        %v509 = vmul.f32 %v464, %v464
        %v510 = vmul.f32 %v465, %v465
        %v511 = vmul.f32 %v466, %v466
        %v512 = vmul.f32 %v467, %v467
        %v513 = vmul.f32 %v468, %v468
        %v514 = vmul.f32 %v469, %v469
        %v515 = vmul.f32 %v470, %v470
        %v516 = vmul.f32 %v471, %v471
        %v517 = vmul.f32 %v472, %v472
        %518 = vset.pattern.permute.xlu0 1
        %519 = vperm.xlu0 %518, %v153
        %v520 = vpop.permute.xlu0 %519
        %522 = vset.pattern.permute.xlu0 1
        %523 = vperm.xlu0 %522, %v154
        %v524 = vpop.permute.xlu0 %523
        %526 = vset.pattern.permute.xlu0 1
        %527 = vperm.xlu0 %526, %v155
        %v528 = vpop.permute.xlu0 %527
        %530 = vset.pattern.permute.xlu0 1
        %531 = vperm.xlu0 %530, %v156
        %v532 = vpop.permute.xlu0 %531
        %534 = vset.pattern.permute.xlu0 1
        %535 = vperm.xlu0 %534, %v157
        %v536 = vpop.permute.xlu0 %535
        %538 = vset.pattern.permute.xlu0 1
        %539 = vperm.xlu0 %538, %v158
        %v540 = vpop.permute.xlu0 %539
        %542 = vset.pattern.permute.xlu0 1
        %543 = vperm.xlu0 %542, %v159
        %v544 = vpop.permute.xlu0 %543
        %546 = vset.pattern.permute.xlu0 1
        %547 = vperm.xlu0 %546, %v160
        %v548 = vpop.permute.xlu0 %547
        %550 = vset.pattern.permute.xlu0 1
        %551 = vperm.xlu0 %550, %v161
        %v552 = vpop.permute.xlu0 %551
        %554 = vset.pattern.permute.xlu0 1
        %555 = vperm.xlu0 %554, %v162
        %v556 = vpop.permute.xlu0 %555
        %558 = vset.pattern.permute.xlu0 1
        %559 = vperm.xlu0 %558, %v163
        %v560 = vpop.permute.xlu0 %559
        %562 = vset.pattern.permute.xlu0 1
        %563 = vperm.xlu0 %562, %v164
        %v564 = vpop.permute.xlu0 %563
        %566 = vset.pattern.permute.xlu0 1
        %567 = vperm.xlu0 %566, %v165
        %v568 = vpop.permute.xlu0 %567
        %570 = vset.pattern.permute.xlu0 1
        %571 = vperm.xlu0 %570, %v166
        %v572 = vpop.permute.xlu0 %571
        %574 = vset.pattern.permute.xlu0 1
        %575 = vperm.xlu0 %574, %v167
        %v576 = vpop.permute.xlu0 %575
        %578 = vset.pattern.permute.xlu0 1
        %579 = vperm.xlu0 %578, %v168
        %v580 = vpop.permute.xlu0 %579
        %582 = vset.pattern.permute.xlu0 1
        %583 = vperm.xlu0 %582, %v169
        %v584 = vpop.permute.xlu0 %583
        %586 = vset.pattern.permute.xlu0 1
        %587 = vperm.xlu0 %586, %v170
        %v588 = vpop.permute.xlu0 %587
        %590 = vset.pattern.permute.xlu0 1
        %591 = vperm.xlu0 %590, %v171
        %v592 = vpop.permute.xlu0 %591
        %594 = vset.pattern.permute.xlu0 1
        %595 = vperm.xlu0 %594, %v172
        %v596 = vpop.permute.xlu0 %595
        %598 = vset.pattern.permute.xlu0 1
        %599 = vperm.xlu0 %598, %v173
        %v600 = vpop.permute.xlu0 %599
        %602 = vset.pattern.permute.xlu0 1
        %603 = vperm.xlu0 %602, %v174
        %v604 = vpop.permute.xlu0 %603
        %606 = vset.pattern.permute.xlu0 1
        %607 = vperm.xlu0 %606, %v175
        %v608 = vpop.permute.xlu0 %607
        %610 = vset.pattern.permute.xlu0 1
        %611 = vperm.xlu0 %610, %v176
        %v612 = vpop.permute.xlu0 %611
        %614 = vset.pattern.permute.xlu0 1
        %615 = vperm.xlu0 %614, %v177
        %v616 = vpop.permute.xlu0 %615
        %618 = vset.pattern.permute.xlu0 1
        %619 = vperm.xlu0 %618, %v178
        %v620 = vpop.permute.xlu0 %619
        %622 = vset.pattern.permute.xlu0 1
        %623 = vperm.xlu0 %622, %v179
        %v624 = vpop.permute.xlu0 %623
        %626 = vset.pattern.permute.xlu0 1
        %627 = vperm.xlu0 %626, %v180
        %v628 = vpop.permute.xlu0 %627
        %630 = vset.pattern.permute.xlu0 1
        %631 = vperm.xlu0 %630, %v181
        %v632 = vpop.permute.xlu0 %631
        %634 = vset.pattern.permute.xlu0 1
        %635 = vperm.xlu0 %634, %v182
        %v636 = vpop.permute.xlu0 %635
        %638 = vset.pattern.permute.xlu0 1
        %639 = vperm.xlu0 %638, %v183
        %v640 = vpop.permute.xlu0 %639
        %642 = vset.pattern.permute.xlu0 1
        %643 = vperm.xlu0 %642, %v184
        %v644 = vpop.permute.xlu0 %643
        %646 = vset.pattern.permute.xlu0 1
        %647 = vperm.xlu0 %646, %v185
        %v648 = vpop.permute.xlu0 %647
        %650 = vset.pattern.permute.xlu0 1
        %651 = vperm.xlu0 %650, %v186
        %v652 = vpop.permute.xlu0 %651
        %654 = vset.pattern.permute.xlu0 1
        %655 = vperm.xlu0 %654, %v187
        %v656 = vpop.permute.xlu0 %655
        %658 = vset.pattern.permute.xlu0 1
        %659 = vperm.xlu0 %658, %v188
        %v660 = vpop.permute.xlu0 %659
        %662 = vset.pattern.permute.xlu0 1
        %663 = vperm.xlu0 %662, %v189
        %v664 = vpop.permute.xlu0 %663
        %666 = vset.pattern.permute.xlu0 1
        %667 = vperm.xlu0 %666, %v190
        %v668 = vpop.permute.xlu0 %667
        %670 = vset.pattern.permute.xlu0 1
        %671 = vperm.xlu0 %670, %v191
        %v672 = vpop.permute.xlu0 %671
        %674 = vset.pattern.permute.xlu0 1
        %675 = vperm.xlu0 %674, %v192
        %v676 = vpop.permute.xlu0 %675
        %678 = vset.pattern.permute.xlu0 1
        %679 = vperm.xlu0 %678, %v193
        %v680 = vpop.permute.xlu0 %679
        %682 = vset.pattern.permute.xlu0 1
        %683 = vperm.xlu0 %682, %v194
        %v684 = vpop.permute.xlu0 %683
        %686 = vset.pattern.permute.xlu0 1
        %687 = vperm.xlu0 %686, %v195
        %v688 = vpop.permute.xlu0 %687
        %690 = vset.pattern.permute.xlu0 1
        %691 = vperm.xlu0 %690, %v196
        %v692 = vpop.permute.xlu0 %691
        %694 = vset.pattern.permute.xlu0 1
        %695 = vperm.xlu0 %694, %v197
        %v696 = vpop.permute.xlu0 %695
        %v698 = vlaneseq
        %v699 = vshrl.u32 %v698, 7
        %v700 = vsub.s32 1, %v699
        %v701 = vrot.slane %v198, %v700
        %v702 = vsub.f32 %v520, %v701
        %v703 = vsub.f32 %v524, %v701
        %v704 = vsub.f32 %v528, %v701
        %v705 = vsub.f32 %v532, %v701
        %v706 = vsub.f32 %v536, %v701
        %v707 = vsub.f32 %v540, %v701
        %v708 = vsub.f32 %v544, %v701
        %v709 = vsub.f32 %v548, %v701
        %v710 = vsub.f32 %v552, %v701
        %v711 = vsub.f32 %v556, %v701
        %v712 = vsub.f32 %v560, %v701
        %v713 = vsub.f32 %v564, %v701
        %v714 = vsub.f32 %v568, %v701
        %v715 = vsub.f32 %v572, %v701
        %v716 = vsub.f32 %v576, %v701
        %v717 = vsub.f32 %v580, %v701
        %v718 = vsub.f32 %v584, %v701
        %v719 = vsub.f32 %v588, %v701
        %v720 = vsub.f32 %v592, %v701
        %v721 = vsub.f32 %v596, %v701
        %v722 = vsub.f32 %v600, %v701
        %v723 = vsub.f32 %v604, %v701
        %v724 = vsub.f32 %v608, %v701
        %v725 = vsub.f32 %v612, %v701
        %v726 = vsub.f32 %v616, %v701
        %v727 = vsub.f32 %v620, %v701
        %v728 = vsub.f32 %v624, %v701
        %v729 = vsub.f32 %v628, %v701
        %v730 = vsub.f32 %v632, %v701
        %v731 = vsub.f32 %v636, %v701
        %v732 = vsub.f32 %v640, %v701
        %v733 = vsub.f32 %v644, %v701
        %v734 = vsub.f32 %v648, %v701
        %v735 = vsub.f32 %v652, %v701
        %v736 = vsub.f32 %v656, %v701
        %v737 = vsub.f32 %v660, %v701
        %v738 = vsub.f32 %v664, %v701
        %v739 = vsub.f32 %v668, %v701
        %v740 = vsub.f32 %v672, %v701
        %v741 = vsub.f32 %v676, %v701
        %v742 = vsub.f32 %v680, %v701
        %v743 = vsub.f32 %v684, %v701
        %v744 = vsub.f32 %v688, %v701
        %v745 = vsub.f32 %v692, %v701
        %v746 = vsub.f32 %v696, %v701
        %v747 = vmul.f32 %v702, %v702
        %v748 = vmul.f32 %v703, %v703
        %v749 = vmul.f32 %v704, %v704
        %v750 = vmul.f32 %v705, %v705
        %v751 = vmul.f32 %v706, %v706
        %v752 = vmul.f32 %v707, %v707
        %v753 = vmul.f32 %v708, %v708
        %v754 = vmul.f32 %v709, %v709
        %v755 = vmul.f32 %v710, %v710
        %v756 = vmul.f32 %v711, %v711
        %v757 = vmul.f32 %v712, %v712
        %v758 = vmul.f32 %v713, %v713
        %v759 = vmul.f32 %v714, %v714
        %v760 = vmul.f32 %v715, %v715
        %v761 = vmul.f32 %v716, %v716
        %v762 = vmul.f32 %v717, %v717
        %v763 = vmul.f32 %v718, %v718
        %v764 = vmul.f32 %v719, %v719
        %v765 = vmul.f32 %v720, %v720
        %v766 = vmul.f32 %v721, %v721
        %v767 = vmul.f32 %v722, %v722
        %v768 = vmul.f32 %v723, %v723
        %v769 = vmul.f32 %v724, %v724
        %v770 = vmul.f32 %v725, %v725
        %v771 = vmul.f32 %v726, %v726
        %v772 = vmul.f32 %v727, %v727
        %v773 = vmul.f32 %v728, %v728
        %v774 = vmul.f32 %v729, %v729
        %v775 = vmul.f32 %v730, %v730
        %v776 = vmul.f32 %v731, %v731
        %v777 = vmul.f32 %v732, %v732
        %v778 = vmul.f32 %v733, %v733
        %v779 = vmul.f32 %v734, %v734
        %v780 = vmul.f32 %v735, %v735
        %v781 = vmul.f32 %v736, %v736
        %v782 = vmul.f32 %v737, %v737
        %v783 = vmul.f32 %v738, %v738
        %v784 = vmul.f32 %v739, %v739
        %v785 = vmul.f32 %v740, %v740
        %v786 = vmul.f32 %v741, %v741
        %v787 = vmul.f32 %v742, %v742
        %v788 = vmul.f32 %v743, %v743
        %v789 = vmul.f32 %v744, %v744
        %v790 = vmul.f32 %v745, %v745
        %v791 = vmul.f32 %v746, %v746
        %v792 = vadd.f32 %v473, %v747
        %v793 = vadd.f32 %v474, %v748
        %v794 = vadd.f32 %v475, %v749
        %v795 = vadd.f32 %v476, %v750
        %v796 = vadd.f32 %v477, %v751
        %v797 = vadd.f32 %v478, %v752
        %v798 = vadd.f32 %v479, %v753
        %v799 = vadd.f32 %v480, %v754
        %v800 = vadd.f32 %v481, %v755
        %v801 = vadd.f32 %v482, %v756
        %v802 = vadd.f32 %v483, %v757
        %v803 = vadd.f32 %v484, %v758
        %v804 = vadd.f32 %v485, %v759
        %v805 = vadd.f32 %v486, %v760
        %v806 = vadd.f32 %v487, %v761
        %v807 = vadd.f32 %v488, %v762
        %v808 = vadd.f32 %v489, %v763
        %v809 = vadd.f32 %v490, %v764
        %v810 = vadd.f32 %v491, %v765
        %v811 = vadd.f32 %v492, %v766
        %v812 = vadd.f32 %v493, %v767
        %v813 = vadd.f32 %v494, %v768
        %v814 = vadd.f32 %v495, %v769
        %v815 = vadd.f32 %v496, %v770
        %v816 = vadd.f32 %v497, %v771
        %v817 = vadd.f32 %v498, %v772
        %v818 = vadd.f32 %v499, %v773
        %v819 = vadd.f32 %v500, %v774
        %v820 = vadd.f32 %v501, %v775
        %v821 = vadd.f32 %v502, %v776
        %v822 = vadd.f32 %v503, %v777
        %v823 = vadd.f32 %v504, %v778
        %v824 = vadd.f32 %v505, %v779
        %v825 = vadd.f32 %v506, %v780
        %v826 = vadd.f32 %v507, %v781
        %v827 = vadd.f32 %v508, %v782
        %v828 = vadd.f32 %v509, %v783
        %v829 = vadd.f32 %v510, %v784
        %v830 = vadd.f32 %v511, %v785
        %v831 = vadd.f32 %v512, %v786
        %v832 = vadd.f32 %v513, %v787
        %v833 = vadd.f32 %v514, %v788
        %v834 = vadd.f32 %v515, %v789
        %v835 = vadd.f32 %v516, %v790
        %v836 = vadd.f32 %v517, %v791
        %837 = vset.pattern.permute.xlu0 2
        %838 = vperm.xlu0 %837, %v153
        %v839 = vpop.permute.xlu0 %838
        %841 = vset.pattern.permute.xlu0 2
        %842 = vperm.xlu0 %841, %v154
        %v843 = vpop.permute.xlu0 %842
        %845 = vset.pattern.permute.xlu0 2
        %846 = vperm.xlu0 %845, %v155
        %v847 = vpop.permute.xlu0 %846
        %849 = vset.pattern.permute.xlu0 2
        %850 = vperm.xlu0 %849, %v156
        %v851 = vpop.permute.xlu0 %850
        %853 = vset.pattern.permute.xlu0 2
        %854 = vperm.xlu0 %853, %v157
        %v855 = vpop.permute.xlu0 %854
        %857 = vset.pattern.permute.xlu0 2
        %858 = vperm.xlu0 %857, %v158
        %v859 = vpop.permute.xlu0 %858
        %861 = vset.pattern.permute.xlu0 2
        %862 = vperm.xlu0 %861, %v159
        %v863 = vpop.permute.xlu0 %862
        %865 = vset.pattern.permute.xlu0 2
        %866 = vperm.xlu0 %865, %v160
        %v867 = vpop.permute.xlu0 %866
        %869 = vset.pattern.permute.xlu0 2
        %870 = vperm.xlu0 %869, %v161
        %v871 = vpop.permute.xlu0 %870
        %873 = vset.pattern.permute.xlu0 2
        %874 = vperm.xlu0 %873, %v162
        %v875 = vpop.permute.xlu0 %874
        %877 = vset.pattern.permute.xlu0 2
        %878 = vperm.xlu0 %877, %v163
        %v879 = vpop.permute.xlu0 %878
        %881 = vset.pattern.permute.xlu0 2
        %882 = vperm.xlu0 %881, %v164
        %v883 = vpop.permute.xlu0 %882
        %885 = vset.pattern.permute.xlu0 2
        %886 = vperm.xlu0 %885, %v165
        %v887 = vpop.permute.xlu0 %886
        %889 = vset.pattern.permute.xlu0 2
        %890 = vperm.xlu0 %889, %v166
        %v891 = vpop.permute.xlu0 %890
        %893 = vset.pattern.permute.xlu0 2
        %894 = vperm.xlu0 %893, %v167
        %v895 = vpop.permute.xlu0 %894
        %897 = vset.pattern.permute.xlu0 2
        %898 = vperm.xlu0 %897, %v168
        %v899 = vpop.permute.xlu0 %898
        %901 = vset.pattern.permute.xlu0 2
        %902 = vperm.xlu0 %901, %v169
        %v903 = vpop.permute.xlu0 %902
        %905 = vset.pattern.permute.xlu0 2
        %906 = vperm.xlu0 %905, %v170
        %v907 = vpop.permute.xlu0 %906
        %909 = vset.pattern.permute.xlu0 2
        %910 = vperm.xlu0 %909, %v171
        %v911 = vpop.permute.xlu0 %910
        %913 = vset.pattern.permute.xlu0 2
        %914 = vperm.xlu0 %913, %v172
        %v915 = vpop.permute.xlu0 %914
        %917 = vset.pattern.permute.xlu0 2
        %918 = vperm.xlu0 %917, %v173
        %v919 = vpop.permute.xlu0 %918
        %921 = vset.pattern.permute.xlu0 2
        %922 = vperm.xlu0 %921, %v174
        %v923 = vpop.permute.xlu0 %922
        %925 = vset.pattern.permute.xlu0 2
        %926 = vperm.xlu0 %925, %v175
        %v927 = vpop.permute.xlu0 %926
        %929 = vset.pattern.permute.xlu0 2
        %930 = vperm.xlu0 %929, %v176
        %v931 = vpop.permute.xlu0 %930
        %933 = vset.pattern.permute.xlu0 2
        %934 = vperm.xlu0 %933, %v177
        %v935 = vpop.permute.xlu0 %934
        %937 = vset.pattern.permute.xlu0 2
        %938 = vperm.xlu0 %937, %v178
        %v939 = vpop.permute.xlu0 %938
        %941 = vset.pattern.permute.xlu0 2
        %942 = vperm.xlu0 %941, %v179
        %v943 = vpop.permute.xlu0 %942
        %945 = vset.pattern.permute.xlu0 2
        %946 = vperm.xlu0 %945, %v180
        %v947 = vpop.permute.xlu0 %946
        %949 = vset.pattern.permute.xlu0 2
        %950 = vperm.xlu0 %949, %v181
        %v951 = vpop.permute.xlu0 %950
        %953 = vset.pattern.permute.xlu0 2
        %954 = vperm.xlu0 %953, %v182
        %v955 = vpop.permute.xlu0 %954
        %957 = vset.pattern.permute.xlu0 2
        %958 = vperm.xlu0 %957, %v183
        %v959 = vpop.permute.xlu0 %958
        %961 = vset.pattern.permute.xlu0 2
        %962 = vperm.xlu0 %961, %v184
        %v963 = vpop.permute.xlu0 %962
        %965 = vset.pattern.permute.xlu0 2
        %966 = vperm.xlu0 %965, %v185
        %v967 = vpop.permute.xlu0 %966
        %969 = vset.pattern.permute.xlu0 2
        %970 = vperm.xlu0 %969, %v186
        %v971 = vpop.permute.xlu0 %970
        %973 = vset.pattern.permute.xlu0 2
        %974 = vperm.xlu0 %973, %v187
        %v975 = vpop.permute.xlu0 %974
        %977 = vset.pattern.permute.xlu0 2
        %978 = vperm.xlu0 %977, %v188
        %v979 = vpop.permute.xlu0 %978
        %981 = vset.pattern.permute.xlu0 2
        %982 = vperm.xlu0 %981, %v189
        %v983 = vpop.permute.xlu0 %982
        %985 = vset.pattern.permute.xlu0 2
        %986 = vperm.xlu0 %985, %v190
        %v987 = vpop.permute.xlu0 %986
        %989 = vset.pattern.permute.xlu0 2
        %990 = vperm.xlu0 %989, %v191
        %v991 = vpop.permute.xlu0 %990
        %993 = vset.pattern.permute.xlu0 2
        %994 = vperm.xlu0 %993, %v192
        %v995 = vpop.permute.xlu0 %994
        %997 = vset.pattern.permute.xlu0 2
        %998 = vperm.xlu0 %997, %v193
        %v999 = vpop.permute.xlu0 %998
        %1001 = vset.pattern.permute.xlu0 2
        %1002 = vperm.xlu0 %1001, %v194
        %v1003 = vpop.permute.xlu0 %1002
        %1005 = vset.pattern.permute.xlu0 2
        %1006 = vperm.xlu0 %1005, %v195
        %v1007 = vpop.permute.xlu0 %1006
        %1009 = vset.pattern.permute.xlu0 2
        %1010 = vperm.xlu0 %1009, %v196
        %v1011 = vpop.permute.xlu0 %1010
        %1013 = vset.pattern.permute.xlu0 2
        %1014 = vperm.xlu0 %1013, %v197
        %v1015 = vpop.permute.xlu0 %1014
        %v1017 = vlaneseq
        %v1018 = vshrl.u32 %v1017, 7
        %v1019 = vsub.s32 2, %v1018
        %v1020 = vrot.slane %v198, %v1019
        %v1021 = vsub.f32 %v839, %v1020
        %v1022 = vsub.f32 %v843, %v1020
        %v1023 = vsub.f32 %v847, %v1020
        %v1024 = vsub.f32 %v851, %v1020
        %v1025 = vsub.f32 %v855, %v1020
        %v1026 = vsub.f32 %v859, %v1020
        %v1027 = vsub.f32 %v863, %v1020
        %v1028 = vsub.f32 %v867, %v1020
        %v1029 = vsub.f32 %v871, %v1020
        %v1030 = vsub.f32 %v875, %v1020
        %v1031 = vsub.f32 %v879, %v1020
        %v1032 = vsub.f32 %v883, %v1020
        %v1033 = vsub.f32 %v887, %v1020
        %v1034 = vsub.f32 %v891, %v1020
        %v1035 = vsub.f32 %v895, %v1020
        %v1036 = vsub.f32 %v899, %v1020
        %v1037 = vsub.f32 %v903, %v1020
        %v1038 = vsub.f32 %v907, %v1020
        %v1039 = vsub.f32 %v911, %v1020
        %v1040 = vsub.f32 %v915, %v1020
        %v1041 = vsub.f32 %v919, %v1020
        %v1042 = vsub.f32 %v923, %v1020
        %v1043 = vsub.f32 %v927, %v1020
        %v1044 = vsub.f32 %v931, %v1020
        %v1045 = vsub.f32 %v935, %v1020
        %v1046 = vsub.f32 %v939, %v1020
        %v1047 = vsub.f32 %v943, %v1020
        %v1048 = vsub.f32 %v947, %v1020
        %v1049 = vsub.f32 %v951, %v1020
        %v1050 = vsub.f32 %v955, %v1020
        %v1051 = vsub.f32 %v959, %v1020
        %v1052 = vsub.f32 %v963, %v1020
        %v1053 = vsub.f32 %v967, %v1020
        %v1054 = vsub.f32 %v971, %v1020
        %v1055 = vsub.f32 %v975, %v1020
        %v1056 = vsub.f32 %v979, %v1020
        %v1057 = vsub.f32 %v983, %v1020
        %v1058 = vsub.f32 %v987, %v1020
        %v1059 = vsub.f32 %v991, %v1020
        %v1060 = vsub.f32 %v995, %v1020
        %v1061 = vsub.f32 %v999, %v1020
        %v1062 = vsub.f32 %v1003, %v1020
        %v1063 = vsub.f32 %v1007, %v1020
        %v1064 = vsub.f32 %v1011, %v1020
        %v1065 = vsub.f32 %v1015, %v1020
        %v1066 = vmul.f32 %v1021, %v1021
        %v1067 = vmul.f32 %v1022, %v1022
        %v1068 = vmul.f32 %v1023, %v1023
        %v1069 = vmul.f32 %v1024, %v1024
        %v1070 = vmul.f32 %v1025, %v1025
        %v1071 = vmul.f32 %v1026, %v1026
        %v1072 = vmul.f32 %v1027, %v1027
        %v1073 = vmul.f32 %v1028, %v1028
        %v1074 = vmul.f32 %v1029, %v1029
        %v1075 = vmul.f32 %v1030, %v1030
        %v1076 = vmul.f32 %v1031, %v1031
        %v1077 = vmul.f32 %v1032, %v1032
        %v1078 = vmul.f32 %v1033, %v1033
        %v1079 = vmul.f32 %v1034, %v1034
        %v1080 = vmul.f32 %v1035, %v1035
        %v1081 = vmul.f32 %v1036, %v1036
        %v1082 = vmul.f32 %v1037, %v1037
        %v1083 = vmul.f32 %v1038, %v1038
        %v1084 = vmul.f32 %v1039, %v1039
        %v1085 = vmul.f32 %v1040, %v1040
        %v1086 = vmul.f32 %v1041, %v1041
        %v1087 = vmul.f32 %v1042, %v1042
        %v1088 = vmul.f32 %v1043, %v1043
        %v1089 = vmul.f32 %v1044, %v1044
        %v1090 = vmul.f32 %v1045, %v1045
        %v1091 = vmul.f32 %v1046, %v1046
        %v1092 = vmul.f32 %v1047, %v1047
        %v1093 = vmul.f32 %v1048, %v1048
        %v1094 = vmul.f32 %v1049, %v1049
        %v1095 = vmul.f32 %v1050, %v1050
        %v1096 = vmul.f32 %v1051, %v1051
        %v1097 = vmul.f32 %v1052, %v1052
        %v1098 = vmul.f32 %v1053, %v1053
        %v1099 = vmul.f32 %v1054, %v1054
        %v1100 = vmul.f32 %v1055, %v1055
        %v1101 = vmul.f32 %v1056, %v1056
        %v1102 = vmul.f32 %v1057, %v1057
        %v1103 = vmul.f32 %v1058, %v1058
        %v1104 = vmul.f32 %v1059, %v1059
        %v1105 = vmul.f32 %v1060, %v1060
        %v1106 = vmul.f32 %v1061, %v1061
        %v1107 = vmul.f32 %v1062, %v1062
        %v1108 = vmul.f32 %v1063, %v1063
        %v1109 = vmul.f32 %v1064, %v1064
        %v1110 = vmul.f32 %v1065, %v1065
        %v1111 = vadd.f32 %v792, %v1066
        %v1112 = vadd.f32 %v793, %v1067
        %v1113 = vadd.f32 %v794, %v1068
        %v1114 = vadd.f32 %v795, %v1069
        %v1115 = vadd.f32 %v796, %v1070
        %v1116 = vadd.f32 %v797, %v1071
        %v1117 = vadd.f32 %v798, %v1072
        %v1118 = vadd.f32 %v799, %v1073
        %v1119 = vadd.f32 %v800, %v1074
        %v1120 = vadd.f32 %v801, %v1075
        %v1121 = vadd.f32 %v802, %v1076
        %v1122 = vadd.f32 %v803, %v1077
        %v1123 = vadd.f32 %v804, %v1078
        %v1124 = vadd.f32 %v805, %v1079
        %v1125 = vadd.f32 %v806, %v1080
        %v1126 = vadd.f32 %v807, %v1081
        %v1127 = vadd.f32 %v808, %v1082
        %v1128 = vadd.f32 %v809, %v1083
        %v1129 = vadd.f32 %v810, %v1084
        %v1130 = vadd.f32 %v811, %v1085
        %v1131 = vadd.f32 %v812, %v1086
        %v1132 = vadd.f32 %v813, %v1087
        %v1133 = vadd.f32 %v814, %v1088
        %v1134 = vadd.f32 %v815, %v1089
        %v1135 = vadd.f32 %v816, %v1090
        %v1136 = vadd.f32 %v817, %v1091
        %v1137 = vadd.f32 %v818, %v1092
        %v1138 = vadd.f32 %v819, %v1093
        %v1139 = vadd.f32 %v820, %v1094
        %v1140 = vadd.f32 %v821, %v1095
        %v1141 = vadd.f32 %v822, %v1096
        %v1142 = vadd.f32 %v823, %v1097
        %v1143 = vadd.f32 %v824, %v1098
        %v1144 = vadd.f32 %v825, %v1099
        %v1145 = vadd.f32 %v826, %v1100
        %v1146 = vadd.f32 %v827, %v1101
        %v1147 = vadd.f32 %v828, %v1102
        %v1148 = vadd.f32 %v829, %v1103
        %v1149 = vadd.f32 %v830, %v1104
        %v1150 = vadd.f32 %v831, %v1105
        %v1151 = vadd.f32 %v832, %v1106
        %v1152 = vadd.f32 %v833, %v1107
        %v1153 = vadd.f32 %v834, %v1108
        %v1154 = vadd.f32 %v835, %v1109
        %v1155 = vadd.f32 %v836, %v1110
        %v1156 = vmin.f32 %v1111, %v1115
        %v1157 = vmin.f32 %v1112, %v1116
        %v1158 = vmin.f32 %v1113, %v1117
        %v1159 = vmin.f32 %v1114, %v1118
        %v1160 = vmin.f32 %v1156, %v1119
        %v1161 = vmin.f32 %v1157, %v1120
        %v1162 = vmin.f32 %v1158, %v1121
        %v1163 = vmin.f32 %v1159, %v1122
        %v1164 = vmin.f32 %v1160, %v1123
        %v1165 = vmin.f32 %v1161, %v1124
        %v1166 = vmin.f32 %v1162, %v1125
        %v1167 = vmin.f32 %v1163, %v1126
        %v1168 = vmin.f32 %v1164, %v1127
        %v1169 = vmin.f32 %v1165, %v1128
        %v1170 = vmin.f32 %v1166, %v1129
        %v1171 = vmin.f32 %v1167, %v1130
        %v1172 = vmin.f32 %v1168, %v1131
        %v1173 = vmin.f32 %v1169, %v1132
        %v1174 = vmin.f32 %v1170, %v1133
        %v1175 = vmin.f32 %v1171, %v1134
        %v1176 = vmin.f32 %v1172, %v1135
        %v1177 = vmin.f32 %v1173, %v1136
        %v1178 = vmin.f32 %v1174, %v1137
        %v1179 = vmin.f32 %v1175, %v1138
        %v1180 = vmin.f32 %v1176, %v1139
        %v1181 = vmin.f32 %v1177, %v1140
        %v1182 = vmin.f32 %v1178, %v1141
        %v1183 = vmin.f32 %v1179, %v1142
        %v1184 = vmin.f32 %v1180, %v1143
        %v1185 = vmin.f32 %v1181, %v1144
        %v1186 = vmin.f32 %v1182, %v1145
        %v1187 = vmin.f32 %v1183, %v1146
        %v1188 = vmin.f32 %v1184, %v1147
        %v1189 = vmin.f32 %v1185, %v1148
        %v1190 = vmin.f32 %v1186, %v1149
        %v1191 = vmin.f32 %v1187, %v1150
        %v1192 = vmin.f32 %v1188, %v1151
        %v1193 = vmin.f32 %v1189, %v1152
        %v1194 = vmin.f32 %v1190, %v1153
        %v1195 = vmin.f32 %v1191, %v1154
        %v1196 = vmin.f32 %v1192, %v1155
        %v1197 = vmin.f32 %v1196, %v1193
        %v1198 = vmin.f32 %v1194, %v1195
        %v1199 = vmin.f32 %v1197, %v1198
        %v1200 = vrot.slane %v1199, 4
        %v1201 = vmin.f32 %v1199, %v1200
        %v1202 = vrot.slane %v1201, 2
        %v1203 = vmin.f32 %v1201, %v1202
        %v1204 = vrot.slane %v1203, 1
        %v1205 = vmin.f32 %v1203, %v1204
        %1206 = vst [vmem:[%s148] sm:$0x1] %v1205
        %s1207 = sand.u32 %s72, 1
        %s1208 = scalar_lea.sflag [#allocation4], %s1207
        %s1209 = sand.u32 %s72, 1
        %s1210 = scalar_lea.vmem [#allocation5], %s1209
        // Predicated region
        $region33: #{_lambda_.1} parent=27 // pred_check
          %p1211 = pneg %p82
        $region34: #{_lambda_.1} parent=27 // pred_check_branch
          %1213 = sbr.rel (%p1211) target = $region36
        $region35: #{_lambda_.1} parent=27 // pred_region
          %s1215 = ssub.s32 16, 16
          %1216 = vsyncadd %s1208, %s1215
          %s1217 = smul.addr %s17, 16
          %s1218 = scalar_lea.hbm %s2, %s1217
          %s1220 = sshll.u32 %s1210, 4
          %s1221 = int_to_ptr.vmem [resolvable:$true] %s1220
          %1223 = dma.vmem_to_hbm [thread:$0]  %s1221, 16, %s1218, %s1208
        $region36: #{_lambda_.1} parent=27 // pred_fallthru
          _
      $region28: #{_lambda_.1} parent=5 // pred_fallthru
        _
      %p1224 = scmp.le.s32.totalorder 2, %s12
      // Predicated region
      $region37: #{_lambda_.1} parent=5 // pred_check
        %p1225 = pneg %p1224
      $region38: #{_lambda_.1} parent=5 // pred_check_branch
        %1227 = sbr.rel (%p1225) target = $region40
      $region39: #{_lambda_.1} parent=5 // pred_region
        %s1228 = ssub.s32 %s12, 2
        // Predicated region
        $region41: #{_lambda_.1} parent=39 // pred_check
          %p1229 = pneg %p88
        $region42: #{_lambda_.1} parent=39 // pred_check_branch
          %1231 = sbr.rel (%p1229) target = $region44
        $region43: #{_lambda_.1} parent=39 // pred_region
          %s1232 = sand.u32 %s73, 1
          %s1233 = scalar_lea.sflag [#allocation4], %s1232
          %s1234 = sand.u32 %s73, 1
          %s1235 = scalar_lea.vmem [#allocation5], %s1234
          %1236 = dma.done %s1233, 16
        $region44: #{_lambda_.1} parent=39 // pred_fallthru
          _
      $region40: #{_lambda_.1} parent=5 // pred_fallthru
        _
    $region6: #{_lambda_.1} parent=1 // loop_footer
      %s16 = sadd.s32 1, %s12
    $region7: #{_lambda_.1} parent=1 // loop_footer_branch
      %11 = sbr.rel target = $region3
    $region8: #{_lambda_.1} parent=1 // loop_exit
      _
    %1237 = vsyncpa [#allocation3], 1
    %s1238 = scalar_lea.sflag [#allocation3], 1
    %1239 = vsyncpa %s1238, 1
    %1240 = vsyncpa [#allocation4], 1
    %s1241 = scalar_lea.sflag [#allocation4], 1
    %1242 = vsyncpa %s1241, 1

</llo_original>
